<compile_context>
chip_gen: v6e
topology: v6e:2x2x1
jax: 0.10.0
libtpu: 0.0.40
codegen_flags: <defaults>
</compile_context>

<pallas_src>
import functools

import jax
import jax.numpy as jnp
from jax.experimental import pallas as pl
from jax.experimental.pallas import tpu as pltpu


# ---------------------------------------------------------------------------
# VMEM budgets (per-chip): keep 2x double-buffered input + acc + output well
# under the physical per-core VMEM (v7x: 64 MiB, v5e/v6e: 128 MiB).
# ---------------------------------------------------------------------------

def _derive_vmem_budgets():
    vmem_bytes = 128 * 1024 * 1024            # conservative v5e/v6e default
    try:
        vmem_bytes = int(pltpu.get_tpu_info().vmem_capacity_bytes)
    except Exception:
        pass
    limit = max(32 * 1024 * 1024, min(vmem_bytes // 2, 64 * 1024 * 1024))
    buf = limit // 4                           # per input DMA buffer (x2 dbuf)
    return buf, limit


_INPUT_BUFFER_BYTES, _VMEM_LIMIT_BYTES = _derive_vmem_budgets()
# Don't shrink tiles below this just to get >=2 parallel steps for v7x's 2 TCs.
_MIN_PARALLEL_TILE_BYTES = 1 * 1024 * 1024


def _lane_pad(n):
    return ((n + 127) // 128) * 128


def _divisors_desc(n, cap):
    return [d for d in range(min(n, max(1, cap)), 0, -1) if n % d == 0]


def _pick_row_tile(n_rows, cap, bytes_per_row):
    """Largest divisor of n_rows <= cap; prefer an even (>=2) number of grid
    steps (v7x megacore) as long as the tile stays >= _MIN_PARALLEL_TILE_BYTES."""
    divs = _divisors_desc(n_rows, cap)
    if not divs:
        return n_rows
    for d in divs:
        if (n_rows // d) % 2 == 0 and d * bytes_per_row >= _MIN_PARALLEL_TILE_BYTES:
            return d
    return divs[0]


def _pick_w_chunk(W, itemsize, rows_per_group, budget):
    """wk = W when one (rows_per_group, W) group fits the budget; otherwise the
    largest multiple-of-128 divisor of W that fits (None if W has none)."""
    if rows_per_group * _lane_pad(W) * itemsize <= budget:
        return W
    if W % 128 != 0:
        return None
    for nd in range(W // 128, 0, -1):
        cand = 128 * nd
        if W % cand == 0 and rows_per_group * cand * itemsize <= budget:
            return cand
    return 128


# ---------------------------------------------------------------------------
# Packed small-W path: W < 128, 128 % W == 0, (M*W) % 128 == 0.
# Rows are packed into full 128-lane vregs; a static block-diagonal ones
# matmul on the MXU reduces each group of W lanes (MXU is otherwise idle).
# ---------------------------------------------------------------------------

def _mean_packed_kernel(x_ref, ones_ref, o_ref, *, inv_w):
    # x_ref: (1, s, 128) packed rows; ones_ref: (128, G) block-diagonal ones.
    sums = jnp.dot(x_ref[0], ones_ref[...], preferred_element_type=jnp.float32)
    o_ref[0] = (sums * inv_w).astype(o_ref.dtype)


def _mean_pool_packed(x2, M, W, input_buffer_bytes=None):
    budget = input_buffer_bytes or _INPUT_BUFFER_BYTES
    G = 128 // W                         # output groups per packed row
    rows = (M * W) // 128                # packed 128-lane rows
    itemsize = x2.dtype.itemsize
    bytes_per_row = 128 * itemsize
    cap = max(1, budget // bytes_per_row)
    s = _pick_row_tile(rows, cap, bytes_per_row)
    g = rows // s

    xp = x2.reshape(g, s, 128)           # free row-major reshape
    lane = jax.lax.broadcasted_iota(jnp.int32, (128, G), 0)
    col = jax.lax.broadcasted_iota(jnp.int32, (128, G), 1)
    ones = jnp.where(lane // W == col, 1, 0).astype(x2.dtype)

    out = pl.pallas_call(
        functools.partial(_mean_packed_kernel, inv_w=1.0 / W),
        out_shape=jax.ShapeDtypeStruct((g, s, G), x2.dtype),
        grid=(g,),
        in_specs=[pl.BlockSpec((1, s, 128), lambda i: (i, 0, 0)),
                  pl.BlockSpec((128, G), lambda i: (0, 0))],
        out_specs=pl.BlockSpec((1, s, G), lambda i: (i, 0, 0)),
        compiler_params=pltpu.CompilerParams(
            dimension_semantics=("parallel",),
            vmem_limit_bytes=_VMEM_LIMIT_BYTES),
    )(xp, ones)
    return out.reshape(M)


# ---------------------------------------------------------------------------
# Lane-dense path (M % 128 == 0): rows grouped 128 at a time, full-width
# (s, 128) output stores.  Direct kernel when the full W fits the budget;
# W-chunked accumulator kernel otherwise.
# ---------------------------------------------------------------------------

def _mean_lane_dense_direct_kernel(x_ref, o_ref, *, inv_w):
    # x_ref: (s, 128, W); o_ref: (1, s, 128) lane-dense means.
    o_ref[0] = (jnp.sum(x_ref[...], axis=-1, dtype=jnp.float32) * inv_w
                ).astype(o_ref.dtype)


def _mean_lane_dense_acc_kernel(x_ref, o_ref, acc_ref, *, inv_w):
    # x_ref: (s, 128, wk) W-chunk; acc_ref: (s, 128) f32 running sum.
    @pl.when(pl.program_id(1) == 0)
    def _init():
        acc_ref[...] = jnp.zeros_like(acc_ref)

    acc_ref[...] += jnp.sum(x_ref[...], axis=-1, dtype=jnp.float32)

    @pl.when(pl.program_id(1) == pl.num_programs(1) - 1)
    def _finalize():
        o_ref[0] = (acc_ref[...] * inv_w).astype(o_ref.dtype)


def _mean_pool_lane_dense(x2, M, W, input_buffer_bytes=None):
    budget = input_buffer_bytes or _INPUT_BUFFER_BYTES
    R = M // 128
    itemsize = x2.dtype.itemsize

    wk = _pick_w_chunk(W, itemsize, 128, budget)
    if wk is None:
        # W not a multiple of 128 and one group overflows the budget (W huge):
        # keep a single chunk and rely on the raised scoped-VMEM limit.
        wk = W
    nk = W // wk

    group_bytes = 128 * _lane_pad(wk) * itemsize
    s = _pick_row_tile(R, max(1, budget // group_bytes), group_bytes)
    gi = R // s

    x3 = x2.reshape(R, 128, W)           # free row-major reshape
    inv_w = 1.0 / W
    params = pltpu.CompilerParams(
        dimension_semantics=("parallel",) if nk == 1 else ("parallel", "arbitrary"),
        vmem_limit_bytes=_VMEM_LIMIT_BYTES)

    if nk == 1:
        out = pl.pallas_call(
            functools.partial(_mean_lane_dense_direct_kernel, inv_w=inv_w),
            out_shape=jax.ShapeDtypeStruct((gi, s, 128), x2.dtype),
            grid=(gi,),
            in_specs=[pl.BlockSpec((s, 128, W), lambda i: (i, 0, 0))],
            out_specs=pl.BlockSpec((1, s, 128), lambda i: (i, 0, 0)),
            compiler_params=params,
        )(x3)
    else:
        out = pl.pallas_call(
            functools.partial(_mean_lane_dense_acc_kernel, inv_w=inv_w),
            out_shape=jax.ShapeDtypeStruct((gi, s, 128), x2.dtype),
            grid=(gi, nk),
            in_specs=[pl.BlockSpec((s, 128, wk), lambda i, k: (i, 0, k))],
            out_specs=pl.BlockSpec((1, s, 128), lambda i, k: (i, 0, 0)),
            scratch_shapes=[pltpu.VMEM((s, 128), jnp.float32)],
            compiler_params=params,
        )(x3)
    return out.reshape(M)


# ---------------------------------------------------------------------------
# Rows fallback (any M): row-tiled, column-shaped output, W-chunked f32
# accumulator when a single row-block would blow the VMEM budget.
# ---------------------------------------------------------------------------

def _mean_rows_direct_kernel(x_ref, o_ref, *, inv_w):
    o_ref[...] = (jnp.sum(x_ref[...], axis=-1, keepdims=True, dtype=jnp.float32)
                  * inv_w).astype(o_ref.dtype)


def _mean_rows_acc_kernel(x_ref, o_ref, acc_ref, *, inv_w):
    @pl.when(pl.program_id(1) == 0)
    def _init():
        acc_ref[...] = jnp.zeros_like(acc_ref)

    acc_ref[...] += jnp.sum(x_ref[...], axis=-1, keepdims=True, dtype=jnp.float32)

    @pl.when(pl.program_id(1) == pl.num_programs(1) - 1)
    def _finalize():
        o_ref[...] = (acc_ref[...] * inv_w).astype(o_ref.dtype)


def _mean_pool_rows(x2, M, W, input_buffer_bytes=None):
    budget = input_buffer_bytes or _INPUT_BUFFER_BYTES
    itemsize = x2.dtype.itemsize

    wk = _pick_w_chunk(W, itemsize, min(M, 256), budget)
    if wk is None:
        wk = W   # TODO(synk): masked-tail chunking for huge W not % 128.
    nk = W // wk

    row_bytes = _lane_pad(wk) * itemsize
    cap = max(1, budget // row_bytes)
    tm = None
    for d in _divisors_desc(M, cap):
        if d % 8 == 0 or d == M:         # (8,128) rule on the (tm, wk) block
            tm = d
            break
    if tm is None:
        tm = M   # TODO(synk): only hit for prime-ish M > cap; single block.
    gi = M // tm

    inv_w = 1.0 / W
    params = pltpu.CompilerParams(
        dimension_semantics=("parallel",) if nk == 1 else ("parallel", "arbitrary"),
        vmem_limit_bytes=_VMEM_LIMIT_BYTES)

    if nk == 1:
        out = pl.pallas_call(
            functools.partial(_mean_rows_direct_kernel, inv_w=inv_w),
            out_shape=jax.ShapeDtypeStruct((M, 1), x2.dtype),
            grid=(gi,),
            in_specs=[pl.BlockSpec((tm, W), lambda i: (i, 0))],
            out_specs=pl.BlockSpec((tm, 1), lambda i: (i, 0)),
            compiler_params=params,
        )(x2)
    else:
        out = pl.pallas_call(
            functools.partial(_mean_rows_acc_kernel, inv_w=inv_w),
            out_shape=jax.ShapeDtypeStruct((M, 1), x2.dtype),
            grid=(gi, nk),
            in_specs=[pl.BlockSpec((tm, wk), lambda i, k: (i, k))],
            out_specs=pl.BlockSpec((tm, 1), lambda i, k: (i, 0)),
            scratch_shapes=[pltpu.VMEM((tm, 1), jnp.float32)],
            compiler_params=params,
        )(x2)
    return out.reshape(M)


# ---------------------------------------------------------------------------
# Dispatch
# ---------------------------------------------------------------------------

def mean_pool_last_dim(x, input_buffer_bytes=None):
    """Mean over the last axis of x (torch's x.mean(dim=-1)), any rank >= 1."""
    lead = x.shape[:-1]
    W = x.shape[-1]
    M = 1
    for d in lead:
        M *= d
    if M == 0 or W == 0:
        return jnp.mean(x, axis=-1)      # degenerate shapes: nothing to tile

    x2 = x.reshape(M, W)

    # Small-W packing: fully lane-dense input stream, MXU group-reduce.
    if (W < 128 and 128 % W == 0 and (M * W) % 128 == 0
            and jnp.issubdtype(x2.dtype, jnp.floating)):
        try:
            return _mean_pool_packed(x2, M, W, input_buffer_bytes).reshape(lead)
        except Exception:
            pass   # eager compile/lowering error: degrade to the paths below

    if M % 128 == 0:
        return _mean_pool_lane_dense(x2, M, W, input_buffer_bytes).reshape(lead)

    return _mean_pool_rows(x2, M, W, input_buffer_bytes).reshape(lead)


def mean_pool(x, dim=-1):
    """Forward pass of the PyTorch MeanPool module: x.mean(dim=dim)."""
    d = dim % x.ndim
    if d != x.ndim - 1:
        x = jnp.moveaxis(x, d, -1)
    return mean_pool_last_dim(x)


if __name__ == "__main__":
    key = jax.random.PRNGKey(0)
    ks = jax.random.split(key, 6)

    # 1) Reference MeanPool case on NCHW (B, C, H, W): W=16 -> packed MXU path.
    x1 = jax.random.normal(ks[0], (2, 4, 16, 16), dtype=jnp.float32)
    out1 = jax.block_until_ready(mean_pool(x1))
    ref1 = jnp.mean(x1, axis=-1)
    assert out1.shape == ref1.shape == (2, 4, 16)
    assert jnp.allclose(out1, ref1, atol=1e-5, rtol=1e-5)

    # 2) Large W (2560): single-pass lane-dense kernel, wk == W (no chunking).
    x2 = jax.random.normal(ks[1], (2, 8, 8, 2560), dtype=jnp.float32)
    out2 = jax.block_until_ready(mean_pool(x2))
    ref2 = jnp.mean(x2, axis=-1)
    assert out2.shape == ref2.shape
    assert jnp.allclose(out2, ref2, atol=1e-4, rtol=1e-4)

    # 3) W-chunked accumulator variant (forced tiny budget exercises it).
    x3 = jax.random.normal(ks[2], (2, 4, 16, 512), dtype=jnp.float32)
    out3 = jax.block_until_ready(
        mean_pool_last_dim(x3, input_buffer_bytes=128 * 1024))
    ref3 = jnp.mean(x3, axis=-1)
    assert jnp.allclose(out3, ref3, atol=1e-4, rtol=1e-4)

    # 4) Rows fallback (M % 128 != 0 and W not packable).
    x4 = jax.random.normal(ks[3], (2, 3, 8, 20), dtype=jnp.float32)
    out4 = jax.block_until_ready(mean_pool(x4))
    ref4 = jnp.mean(x4, axis=-1)
    assert out4.shape == ref4.shape
    assert jnp.allclose(out4, ref4, atol=1e-5, rtol=1e-5)

    # 5) Rows fallback with W-chunked accumulator (forced tiny budget).
    x5 = jax.random.normal(ks[4], (2, 3, 8, 512), dtype=jnp.float32)
    out5 = jax.block_until_ready(
        mean_pool_last_dim(x5, input_buffer_bytes=64 * 1024))
    ref5 = jnp.mean(x5, axis=-1)
    assert jnp.allclose(out5, ref5, atol=1e-4, rtol=1e-4)

    # 6) bf16 input (f32 accumulation inside the kernel, bf16 output).
    x6 = jax.random.normal(ks[5], (2, 4, 16, 16), dtype=jnp.bfloat16)
    out6 = jax.block_until_ready(mean_pool(x6))
    ref6 = jnp.mean(x6.astype(jnp.float32), axis=-1).astype(jnp.bfloat16)
    assert out6.shape == ref6.shape
    assert jnp.allclose(out6.astype(jnp.float32), ref6.astype(jnp.float32),
                        atol=1e-2, rtol=1e-2)

    print("KERNEL_OK")
</pallas_src>

<mosaic_0001>
module attributes {stable_mosaic.version = 11 : i64} {
  func.func @_mean_packed_kernel(%arg0: i32, %arg1: memref<1x16x128xf32, #tpu.memory_space<vmem>>, %arg2: memref<128x8xf32, #tpu.memory_space<vmem>>, %arg3: memref<1x16x8xf32, #tpu.memory_space<vmem>>) attributes {dimension_semantics = [#tpu.dimension_semantics<parallel>], iteration_bounds = array<i64: 1>, scalar_prefetch = 0 : i64, scratch_operands = 0 : i64, tpu.core_type = #tpu.core_type<tc>, window_params = [{transform_indices = @transform_0, window_bounds = array<i64: 1, 16, 128>}, {pipeline_mode = #tpu.pipeline_mode<synchronous>, transform_indices = @transform_1, window_bounds = array<i64: 128, 8>}, {transform_indices = @transform_2, window_bounds = array<i64: 1, 16, 8>}]} {
    %c0 = arith.constant 0 : index
    %c0_0 = arith.constant 0 : index
    %c0_1 = arith.constant 0 : index
    %0 = vector.load %arg1[%c0, %c0_0, %c0_1] : memref<1x16x128xf32, #tpu.memory_space<vmem>>, vector<1x16x128xf32>
    %1 = vector.shape_cast %0 : vector<1x16x128xf32> to vector<16x128xf32>
    %c0_2 = arith.constant 0 : index
    %c0_3 = arith.constant 0 : index
    %2 = vector.load %arg2[%c0_2, %c0_3] : memref<128x8xf32, #tpu.memory_space<vmem>>, vector<128x8xf32>
    %cst = arith.constant dense<0.000000e+00> : vector<16x8xf32>
    %3 = tpu.matmul %1, %2, %cst {dimension_numbers = #tpu.dot_dimension_numbers<[1], [0], [0], [1], [0, 0, 1, 1], [], []>} : vector<16x128xf32>, vector<128x8xf32>, vector<16x8xf32> -> vector<16x8xf32>
    %cst_4 = arith.constant 6.250000e-02 : f32
    %4 = vector.broadcast %cst_4 : f32 to vector<16x8xf32>
    %5 = arith.mulf %3, %4 : vector<16x8xf32>
    %c0_5 = arith.constant 0 : index
    %c0_6 = arith.constant 0 : index
    %c0_7 = arith.constant 0 : index
    %6 = vector.load %arg3[%c0_5, %c0_6, %c0_7] : memref<1x16x8xf32, #tpu.memory_space<vmem>>, vector<1x16x8xf32>
    %7 = vector.shape_cast %6 : vector<1x16x8xf32> to vector<16x8xf32>
    %8 = vector.shape_cast %5 : vector<16x8xf32> to vector<1x16x8xf32>
    tpu.vector_store %arg3[%c0_5, %c0_6, %c0_7], %8 {strides = array<i32>} : memref<1x16x8xf32, #tpu.memory_space<vmem>>, vector<1x16x8xf32>,
    return
  }
  func.func @transform_0(%arg0: i32) -> (i32, i32, i32) {
    %c0_i32 = arith.constant 0 : i32
    %c0_i32_0 = arith.constant 0 : i32
    %c0_i32_1 = arith.constant 0 : i32
    return %arg0, %c0_i32, %c0_i32_0 : i32, i32, i32
  }
  func.func @transform_1(%arg0: i32) -> (i32, i32) {
    %c0_i32 = arith.constant 0 : i32
    %c0_i32_0 = arith.constant 0 : i32
    %c0_i32_1 = arith.constant 0 : i32
    return %c0_i32, %c0_i32_0 : i32, i32
  }
  func.func @transform_2(%arg0: i32) -> (i32, i32, i32) {
    %c0_i32 = arith.constant 0 : i32
    %c0_i32_0 = arith.constant 0 : i32
    %c0_i32_1 = arith.constant 0 : i32
    return %arg0, %c0_i32, %c0_i32_0 : i32, i32, i32
  }
}

module attributes {stable_mosaic.version = 11 : i64} {
  func.func @_mean_lane_dense_direct_kernel(%arg0: i32, %arg1: memref<1x128x16xf32, #tpu.memory_space<vmem>>, %arg2: memref<1x1x128xf32, #tpu.memory_space<vmem>>) attributes {dimension_semantics = [#tpu.dimension_semantics<parallel>], iteration_bounds = array<i64: 1>, scalar_prefetch = 0 : i64, scratch_operands = 0 : i64, tpu.core_type = #tpu.core_type<tc>, window_params = [{transform_indices = @transform_0, window_bounds = array<i64: 1, 128, 16>}, {transform_indices = @transform_1, window_bounds = array<i64: 1, 1, 128>}]} {
    %c0 = arith.constant 0 : index
    %c0_0 = arith.constant 0 : index
    %c0_1 = arith.constant 0 : index
    %0 = vector.load %arg1[%c0, %c0_0, %c0_1] : memref<1x128x16xf32, #tpu.memory_space<vmem>>, vector<1x128x16xf32>
    %cst = arith.constant dense<0.000000e+00> : vector<1x128xf32>
    %1 = vector.multi_reduction <add>, %0, %cst [2] : vector<1x128x16xf32> to vector<1x128xf32>
    %cst_2 = arith.constant 6.250000e-02 : f32
    %2 = vector.broadcast %cst_2 : f32 to vector<1x128xf32>
    %3 = arith.mulf %1, %2 : vector<1x128xf32>
    %c0_3 = arith.constant 0 : index
    %c0_4 = arith.constant 0 : index
    %c0_5 = arith.constant 0 : index
    %4 = vector.load %arg2[%c0_3, %c0_4, %c0_5] : memref<1x1x128xf32, #tpu.memory_space<vmem>>, vector<1x1x128xf32>
    %5 = vector.shape_cast %4 : vector<1x1x128xf32> to vector<1x128xf32>
    %6 = vector.shape_cast %3 : vector<1x128xf32> to vector<1x1x128xf32>
    tpu.vector_store %arg2[%c0_3, %c0_4, %c0_5], %6 {strides = array<i32>} : memref<1x1x128xf32, #tpu.memory_space<vmem>>, vector<1x1x128xf32>,
    return
  }
  func.func @transform_0(%arg0: i32) -> (i32, i32, i32) {
    %c0_i32 = arith.constant 0 : i32
    %c0_i32_0 = arith.constant 0 : i32
    %c0_i32_1 = arith.constant 0 : i32
    return %arg0, %c0_i32, %c0_i32_0 : i32, i32, i32
  }
  func.func @transform_1(%arg0: i32) -> (i32, i32, i32) {
    %c0_i32 = arith.constant 0 : i32
    %c0_i32_0 = arith.constant 0 : i32
    %c0_i32_1 = arith.constant 0 : i32
    return %arg0, %c0_i32, %c0_i32_0 : i32, i32, i32
  }
}

</mosaic_0001>

<llo_original>
// kernel: tpu_custom_call.1
$region0: #{tpu_custom_call.1}
  #allocation0 [shape = 'u32[]', space=smem, size = 0x4, offset = 0x4, fixed_abs, tag = 'smem constant byte address 0x4 - core index']
  #allocation1 [shape = 'u32[144,128]{1,0:T(1,128)}', space=vmem, size = 0x12000, scoped, tag = 'internal scratch']
  %s0 = inlined_call_operand.vmem [shape: f32[1,16,128], index: 0, kind: input, shape index: {}]
  %s1 = inlined_call_operand.vmem [shape: f32[128,8], index: 1, kind: input, shape index: {}]
  %s2 = inlined_call_operand.vmem [shape: f32[1,16,8], index: 2, kind: output, shape index: {}]
  %s3 = sld [smem:[#allocation0]]
  $region18: #{tpu_custom_call.1} parent=0
    _
  %s5 = ssub.s32 1, %s3
  %s6 = scalar_select 0, %s5, %s3
  // Predicated region
  $region2: #{tpu_custom_call.1} parent=0 // pred_check
    _
  $region3: #{tpu_custom_call.1} parent=0 // pred_check_branch
    %8 = sbr.rel (0) target = $region5
  $region4: #{tpu_custom_call.1} parent=0 // pred_region
    _
  $region5: #{tpu_custom_call.1} parent=0 // pred_fallthru
    _
  // Predicated region
  $region6: #{tpu_custom_call.1} parent=0 // pred_check
    _
  $region7: #{tpu_custom_call.1} parent=0 // pred_check_branch
    %10 = sbr.rel (0) target = $region9
  $region8: #{tpu_custom_call.1} parent=0 // pred_region
    _
  $region9: #{tpu_custom_call.1} parent=0 // pred_fallthru
    _
  %v11 = vld [vmem:[%s0] sm:$0xff]
  %v12 = vld [vmem:[%s0 + $0x8] sm:$0xff]
  %v13 = vld [vmem:[%s1] sm:$0xff]
  %v14 = vld [vmem:[%s1 + $0x8] sm:$0xff]
  %v15 = vld [vmem:[%s1 + $0x10] sm:$0xff]
  %v16 = vld [vmem:[%s1 + $0x18] sm:$0xff]
  %v17 = vld [vmem:[%s1 + $0x20] sm:$0xff]
  %v18 = vld [vmem:[%s1 + $0x28] sm:$0xff]
  %v19 = vld [vmem:[%s1 + $0x30] sm:$0xff]
  %v20 = vld [vmem:[%s1 + $0x38] sm:$0xff]
  %v21 = vld [vmem:[%s1 + $0x40] sm:$0xff]
  %v22 = vld [vmem:[%s1 + $0x48] sm:$0xff]
  %v23 = vld [vmem:[%s1 + $0x50] sm:$0xff]
  %v24 = vld [vmem:[%s1 + $0x58] sm:$0xff]
  %v25 = vld [vmem:[%s1 + $0x60] sm:$0xff]
  %v26 = vld [vmem:[%s1 + $0x68] sm:$0xff]
  %v27 = vld [vmem:[%s1 + $0x70] sm:$0xff]
  %v28 = vld [vmem:[%s1 + $0x78] sm:$0xff]
  %29 = vmatprep.subr.mxu0 0.0
  %30 = vmatpush1.msra.mxu0 %v28
  %31 = vmatprep.subr.mxu0 0.0
  %32 = vmatpush1.msra.mxu0 %v27
  %33 = vmatprep.subr.mxu0 0.0
  %34 = vmatpush1.msra.mxu0 %v26
  %35 = vmatprep.subr.mxu0 0.0
  %36 = vmatpush1.msra.mxu0 %v25
  %37 = vmatprep.subr.mxu0 0.0
  %38 = vmatpush1.msra.mxu0 %v24
  %39 = vmatprep.subr.mxu0 0.0
  %40 = vmatpush1.msra.mxu0 %v23
  %41 = vmatprep.subr.mxu0 0.0
  %42 = vmatpush1.msra.mxu0 %v22
  %43 = vmatprep.subr.mxu0 0.0
  %44 = vmatpush1.msra.mxu0 %v21
  %45 = vmatprep.subr.mxu0 0.0
  %46 = vmatpush1.msra.mxu0 %v20
  %47 = vmatprep.subr.mxu0 0.0
  %48 = vmatpush1.msra.mxu0 %v19
  %49 = vmatprep.subr.mxu0 0.0
  %50 = vmatpush1.msra.mxu0 %v18
  %51 = vmatprep.subr.mxu0 0.0
  %52 = vmatpush1.msra.mxu0 %v17
  %53 = vmatprep.subr.mxu0 0.0
  %54 = vmatpush1.msra.mxu0 %v16
  %55 = vmatprep.subr.mxu0 0.0
  %56 = vmatpush1.msra.mxu0 %v15
  %57 = vmatprep.subr.mxu0 0.0
  %58 = vmatpush1.msra.mxu0 %v14
  %59 = vmatprep.subr.mxu0 0.0
  %60 = vmatpush1.msra.mxu0 %v13
  %61 = vmatprep.subr.mxu0 0.0
  %62 = vmatpush2.msra.mxu0 0.0
  %63 = vmatprep.subr.mxu0 0.0
  %64 = vmatpush2.msra.mxu0 0.0
  %65 = vmatprep.subr.mxu0 0.0
  %66 = vmatpush2.msra.mxu0 0.0
  %67 = vmatprep.subr.mxu0 0.0
  %68 = vmatpush2.msra.mxu0 0.0
  %69 = vmatprep.subr.mxu0 0.0
  %70 = vmatpush2.msra.mxu0 0.0
  %71 = vmatprep.subr.mxu0 0.0
  %72 = vmatpush2.msra.mxu0 0.0
  %73 = vmatprep.subr.mxu0 0.0
  %74 = vmatpush2.msra.mxu0 0.0
  %75 = vmatprep.subr.mxu0 0.0
  %76 = vmatpush2.msra.mxu0 0.0
  %77 = vmatprep.subr.mxu0 0.0
  %78 = vmatpush2.msra.mxu0 0.0
  %79 = vmatprep.subr.mxu0 0.0
  %80 = vmatpush2.msra.mxu0 0.0
  %81 = vmatprep.subr.mxu0 0.0
  %82 = vmatpush2.msra.mxu0 0.0
  %83 = vmatprep.subr.mxu0 0.0
  %84 = vmatpush2.msra.mxu0 0.0
  %85 = vmatprep.subr.mxu0 0.0
  %86 = vmatpush2.msra.mxu0 0.0
  %87 = vmatprep.subr.mxu0 0.0
  %88 = vmatpush2.msra.mxu0 0.0
  %89 = vmatprep.subr.mxu0 0.0
  %90 = vmatpush2.msra.mxu0 0.0
  %91 = vmatprep.subr.mxu0 0.0
  %92 = vmatpush2.msra.mxu0 0.0
  %93 = vmatprep.mubr.f32.mxu0 0.0
  %94 = vmatmul.mubr.f32.gmra.mxu0 %v11
  %v95 = vpop.f32.mrf.mxu0
  %v96 = vadd.f32 0.0, %v95
  %v97 = vpop.f32.mrf.mxu0
  %98 = vmatprep.mubr.f32.mxu0 0.0
  %99 = vmatmul.mubr.f32.gmra.mxu0 %v12
  %v100 = vpop.f32.mrf.mxu0
  %v101 = vadd.f32 0.0, %v100
  %v102 = vpop.f32.mrf.mxu0
  %103 = vdwg.mxu0
  %v104 = vmul.f32 %v96, 0.0625
  %v105 = vmul.f32 %v101, 0.0625
  %vm106 = vcmask 64512
  %107 = vst.msk [vmem:[%s2] sm:$0xff] %vm106, %v104
  %108 = vst.msk [vmem:[%s2 + $0x8] sm:$0xff] %vm106, %v105
  // Predicated region
  $region10: #{tpu_custom_call.1} parent=0 // pred_check
    _
  $region11: #{tpu_custom_call.1} parent=0 // pred_check_branch
    %110 = sbr.rel (0) target = $region13
  $region12: #{tpu_custom_call.1} parent=0 // pred_region
    _
  $region13: #{tpu_custom_call.1} parent=0 // pred_fallthru
    _
  // Predicated region
  $region14: #{tpu_custom_call.1} parent=0 // pred_check
    _
  $region15: #{tpu_custom_call.1} parent=0 // pred_check_branch
    %112 = sbr.rel (0) target = $region17
  $region16: #{tpu_custom_call.1} parent=0 // pred_region
    _
  $region17: #{tpu_custom_call.1} parent=0 // pred_fallthru
    _

// kernel: tpu_custom_call.1
$region0: #{tpu_custom_call.1}
  #allocation0 [shape = 'u32[]', space=smem, size = 0x4, offset = 0x4, fixed_abs, tag = 'smem constant byte address 0x4 - core index']
  #allocation1 [shape = 'u32[144,128]{1,0:T(1,128)}', space=vmem, size = 0x12000, scoped, tag = 'internal scratch']
  %s0 = inlined_call_operand.vmem [shape: f32[1,128,16], index: 0, kind: input, shape index: {}]
  %s1 = inlined_call_operand.hbm [shape: f32[1,1,128], index: 1, kind: output, shape index: {}]
  %s2 = sld [smem:[#allocation0]]
  $region14: #{tpu_custom_call.1} parent=0
    _
  %s4 = ssub.s32 1, %s2
  %s5 = scalar_select 0, %s4, %s2
  $region1: #{tpu_custom_call.1} parent=0
    #allocation2 [shape = 'u8[512]{0}', space=vmem, size = 0x400, scoped, tag = 'output window, operand 0, single buffered']
    #allocation3 [shape = 's32[1]{0}', space=sflag, size = 0x4, scoped, tag = 'scoped memory for tpu_custom_call.1']
    %6 = vsyncpa [#allocation3], 0
    // Predicated region
    $region2: #{tpu_custom_call.1} parent=1 // pred_check
      _
    $region3: #{tpu_custom_call.1} parent=1 // pred_check_branch
      %8 = sbr.rel (0) target = $region5
    $region4: #{tpu_custom_call.1} parent=1 // pred_region
      _
    $region5: #{tpu_custom_call.1} parent=1 // pred_fallthru
      _
    %v9 = vld [vmem:[%s0] sm:$0xff]
    %v10 = vld [vmem:[%s0 + $0x8] sm:$0xff]
    %v11 = vld [vmem:[%s0 + $0x10] sm:$0xff]
    %v12 = vld [vmem:[%s0 + $0x18] sm:$0xff]
    %v13 = vld [vmem:[%s0 + $0x20] sm:$0xff]
    %v14 = vld [vmem:[%s0 + $0x28] sm:$0xff]
    %v15 = vld [vmem:[%s0 + $0x30] sm:$0xff]
    %v16 = vld [vmem:[%s0 + $0x38] sm:$0xff]
    %v17 = vld [vmem:[%s0 + $0x40] sm:$0xff]
    %v18 = vld [vmem:[%s0 + $0x48] sm:$0xff]
    %v19 = vld [vmem:[%s0 + $0x50] sm:$0xff]
    %v20 = vld [vmem:[%s0 + $0x58] sm:$0xff]
    %v21 = vld [vmem:[%s0 + $0x60] sm:$0xff]
    %v22 = vld [vmem:[%s0 + $0x68] sm:$0xff]
    %v23 = vld [vmem:[%s0 + $0x70] sm:$0xff]
    %v24 = vld [vmem:[%s0 + $0x78] sm:$0xff]
    %vm25 = vcmask 130048
    %v26 = vsel %vm25, %v9, 0.0
    %27 = vadd.xlane.f32.xlu0 %v26
    %v28 = vpop.xlane.xlu0 %27
    %v29 = vsel %vm25, %v10, 0.0
    %30 = vadd.xlane.f32.xlu0 %v29
    %v31 = vpop.xlane.xlu0 %30
    %v32 = vsel %vm25, %v11, 0.0
    %33 = vadd.xlane.f32.xlu0 %v32
    %v34 = vpop.xlane.xlu0 %33
    %v35 = vsel %vm25, %v12, 0.0
    %36 = vadd.xlane.f32.xlu0 %v35
    %v37 = vpop.xlane.xlu0 %36
    %v38 = vsel %vm25, %v13, 0.0
    %39 = vadd.xlane.f32.xlu0 %v38
    %v40 = vpop.xlane.xlu0 %39
    %v41 = vsel %vm25, %v14, 0.0
    %42 = vadd.xlane.f32.xlu0 %v41
    %v43 = vpop.xlane.xlu0 %42
    %v44 = vsel %vm25, %v15, 0.0
    %45 = vadd.xlane.f32.xlu0 %v44
    %v46 = vpop.xlane.xlu0 %45
    %v47 = vsel %vm25, %v16, 0.0
    %48 = vadd.xlane.f32.xlu0 %v47
    %v49 = vpop.xlane.xlu0 %48
    %v50 = vsel %vm25, %v17, 0.0
    %51 = vadd.xlane.f32.xlu0 %v50
    %v52 = vpop.xlane.xlu0 %51
    %v53 = vsel %vm25, %v18, 0.0
    %54 = vadd.xlane.f32.xlu0 %v53
    %v55 = vpop.xlane.xlu0 %54
    %v56 = vsel %vm25, %v19, 0.0
    %57 = vadd.xlane.f32.xlu0 %v56
    %v58 = vpop.xlane.xlu0 %57
    %v59 = vsel %vm25, %v20, 0.0
    %60 = vadd.xlane.f32.xlu0 %v59
    %v61 = vpop.xlane.xlu0 %60
    %v62 = vsel %vm25, %v21, 0.0
    %63 = vadd.xlane.f32.xlu0 %v62
    %v64 = vpop.xlane.xlu0 %63
    %v65 = vsel %vm25, %v22, 0.0
    %66 = vadd.xlane.f32.xlu0 %v65
    %v67 = vpop.xlane.xlu0 %66
    %v68 = vsel %vm25, %v23, 0.0
    %69 = vadd.xlane.f32.xlu0 %v68
    %v70 = vpop.xlane.xlu0 %69
    %v71 = vsel %vm25, %v24, 0.0
    %72 = vadd.xlane.f32.xlu0 %v71
    %v73 = vpop.xlane.xlu0 %72
    %v74 = vmul.f32 %v28, 0.0625
    %v75 = vmul.f32 %v31, 0.0625
    %v76 = vmul.f32 %v34, 0.0625
    %v77 = vmul.f32 %v37, 0.0625
    %v78 = vmul.f32 %v40, 0.0625
    %v79 = vmul.f32 %v43, 0.0625
    %v80 = vmul.f32 %v46, 0.0625
    %v81 = vmul.f32 %v49, 0.0625
    %v82 = vmul.f32 %v52, 0.0625
    %v83 = vmul.f32 %v55, 0.0625
    %v84 = vmul.f32 %v58, 0.0625
    %v85 = vmul.f32 %v61, 0.0625
    %v86 = vmul.f32 %v64, 0.0625
    %v87 = vmul.f32 %v67, 0.0625
    %v88 = vmul.f32 %v70, 0.0625
    %v89 = vmul.f32 %v73, 0.0625
    %v106 = vlaneseq
    %v107 = vand.u32 %v106, 127
    %v108 = vlaneseq
    %v109 = vshrl.u32 %v108, 7
    %v110 = vsub.s32 %v107, %v109
    %v111 = vrot.slane %v74, %v110
    %v112 = vadd.s32 %v107, 4294967288
    %v113 = vlaneseq
    %v114 = vshrl.u32 %v113, 7
    %v115 = vsub.s32 %v112, %v114
    %v116 = vrot.slane %v75, %v115
    %vm117 = vcmask 130112
    %v118 = vsel %vm117, %v116, %v111
    %v119 = vadd.s32 %v107, 4294967280
    %v120 = vlaneseq
    %v121 = vshrl.u32 %v120, 7
    %v122 = vsub.s32 %v119, %v121
    %v123 = vrot.slane %v76, %v122
    %vm124 = vcmask 195712
    %v125 = vsel %vm124, %v123, %v118
    %v126 = vadd.s32 %v107, 4294967272
    %v127 = vlaneseq
    %v128 = vshrl.u32 %v127, 7
    %v129 = vsub.s32 %v126, %v128
    %v130 = vrot.slane %v77, %v129
    %vm131 = vcmask 261312
    %v132 = vsel %vm131, %v130, %v125
    %v133 = vadd.s32 %v107, 4294967264
    %v134 = vlaneseq
    %v135 = vshrl.u32 %v134, 7
    %v136 = vsub.s32 %v133, %v135
    %v137 = vrot.slane %v78, %v136
    %vm138 = vcmask 326912
    %v139 = vsel %vm138, %v137, %v132
    %v140 = vadd.s32 %v107, 4294967256
    %v141 = vlaneseq
    %v142 = vshrl.u32 %v141, 7
    %v143 = vsub.s32 %v140, %v142
    %v144 = vrot.slane %v79, %v143
    %vm145 = vcmask 392512
    %v146 = vsel %vm145, %v144, %v139
    %v147 = vadd.s32 %v107, 4294967248
    %v148 = vlaneseq
    %v149 = vshrl.u32 %v148, 7
    %v150 = vsub.s32 %v147, %v149
    %v151 = vrot.slane %v80, %v150
    %vm152 = vcmask 458112
    %v153 = vsel %vm152, %v151, %v146
    %v154 = vadd.s32 %v107, 4294967240
    %v155 = vlaneseq
    %v156 = vshrl.u32 %v155, 7
    %v157 = vsub.s32 %v154, %v156
    %v158 = vrot.slane %v81, %v157
    %vm159 = vcmask 523712
    %v160 = vsel %vm159, %v158, %v153
    %v161 = vadd.s32 %v107, 4294967232
    %v162 = vlaneseq
    %v163 = vshrl.u32 %v162, 7
    %v164 = vsub.s32 %v161, %v163
    %v165 = vrot.slane %v82, %v164
    %vm166 = vcmask 589312
    %v167 = vsel %vm166, %v165, %v160
    %v168 = vadd.s32 %v107, 4294967224
    %v169 = vlaneseq
    %v170 = vshrl.u32 %v169, 7
    %v171 = vsub.s32 %v168, %v170
    %v172 = vrot.slane %v83, %v171
    %vm173 = vcmask 654912
    %v174 = vsel %vm173, %v172, %v167
    %v175 = vadd.s32 %v107, 4294967216
    %v176 = vlaneseq
    %v177 = vshrl.u32 %v176, 7
    %v178 = vsub.s32 %v175, %v177
    %v179 = vrot.slane %v84, %v178
    %vm180 = vcmask 720512
    %v181 = vsel %vm180, %v179, %v174
    %v182 = vadd.s32 %v107, 4294967208
    %v183 = vlaneseq
    %v184 = vshrl.u32 %v183, 7
    %v185 = vsub.s32 %v182, %v184
    %v186 = vrot.slane %v85, %v185
    %vm187 = vcmask 786112
    %v188 = vsel %vm187, %v186, %v181
    %v189 = vadd.s32 %v107, 4294967200
    %v190 = vlaneseq
    %v191 = vshrl.u32 %v190, 7
    %v192 = vsub.s32 %v189, %v191
    %v193 = vrot.slane %v86, %v192
    %vm194 = vcmask 851712
    %v195 = vsel %vm194, %v193, %v188
    %v196 = vadd.s32 %v107, 4294967192
    %v197 = vlaneseq
    %v198 = vshrl.u32 %v197, 7
    %v199 = vsub.s32 %v196, %v198
    %v200 = vrot.slane %v87, %v199
    %vm201 = vcmask 917312
    %v202 = vsel %vm201, %v200, %v195
    %v203 = vadd.s32 %v107, 4294967184
    %v204 = vlaneseq
    %v205 = vshrl.u32 %v204, 7
    %v206 = vsub.s32 %v203, %v205
    %v207 = vrot.slane %v88, %v206
    %vm208 = vcmask 982912
    %v209 = vsel %vm208, %v207, %v202
    %v210 = vadd.s32 %v107, 4294967176
    %v211 = vlaneseq
    %v212 = vshrl.u32 %v211, 7
    %v213 = vsub.s32 %v210, %v212
    %v214 = vrot.slane %v89, %v213
    %vm215 = vcmask 1048512
    %v216 = vsel %vm215, %v214, %v209
    %218 = vst [vmem:[#allocation2] sm:$0x1] %v216
    // Predicated region
    $region6: #{tpu_custom_call.1} parent=1 // pred_check
      _
    $region7: #{tpu_custom_call.1} parent=1 // pred_check_branch
      %220 = sbr.rel (0) target = $region9
    $region8: #{tpu_custom_call.1} parent=1 // pred_region
      %s222 = ssub.s32 16, 16
      %223 = vsyncadd [#allocation3], %s222
      %s225 = sshll.u32 [#allocation2], 4
      %s226 = int_to_ptr.vmem [resolvable:$true] %s225
      %228 = dma.vmem_to_hbm [thread:$0]  %s226, 16, %s1, [#allocation3]
    $region9: #{tpu_custom_call.1} parent=1 // pred_fallthru
      _
    // Predicated region
    $region10: #{tpu_custom_call.1} parent=1 // pred_check
      _
    $region11: #{tpu_custom_call.1} parent=1 // pred_check_branch
      %230 = sbr.rel (0) target = $region13
    $region12: #{tpu_custom_call.1} parent=1 // pred_region
      %231 = dma.done [#allocation3], 16
    $region13: #{tpu_custom_call.1} parent=1 // pred_fallthru
      _
    %232 = vsyncpa [#allocation3], 1

</llo_original>
